<compile_context>
chip_gen: v7x
topology: tpu7x:2x2x1
jax: 0.10.0
libtpu: 0.0.40
codegen_flags: <defaults>
</compile_context>

<pallas_src>
import functools

import jax
import jax.numpy as jnp
from jax.experimental import pallas as pl
from jax.experimental.pallas import tpu as pltpu

BN_EPS = 1e-5
LEAKY_SLOPE = 0.01  # nn.LeakyReLU() default
H1 = 512
H2 = 128


def _bn_leaky(h, gamma, beta):
    """Training-mode BatchNorm1d (biased var, two-pass) + affine + LeakyReLU.

    h: (B, N) f32; gamma/beta: (1, N) f32 rows broadcast over batch.
    """
    mean = jnp.mean(h, axis=0, keepdims=True)         # (1, N)
    d = h - mean                                      # centered activations
    var = jnp.mean(d * d, axis=0, keepdims=True)      # two-pass biased variance
    scale = gamma * jax.lax.rsqrt(var + BN_EPS)       # (1, N) row -> EUP rsqrt
    y = d * scale + beta                              # single fused full pass
    return jnp.maximum(y, LEAKY_SLOPE * y)            # LeakyReLU (0 < slope < 1)


def mlp_kernel(x_ref, w_ref, p_ref, o_ref, *, dim_in):
    # p_ref is (2, H1 + H2): row 0 = [gamma1 | gamma2], row 1 = [beta1 | beta2].
    g1, be1 = p_ref[0:1, 0:H1], p_ref[1:2, 0:H1]
    g2, be2 = p_ref[0:1, H1:H1 + H2], p_ref[1:2, H1:H1 + H2]

    # w_ref is (dim_in + H2, H1): rows [0:dim_in] = w1.T, rows [dim_in:] = w2
    # (un-transposed Linear weight). Static, sublane-aligned slices -> free views.
    w1t = w_ref[0:dim_in, :]                 # (dim_in, H1)
    w2 = w_ref[dim_in:dim_in + H2, :]        # (H2, H1)

    # Layer 1: Linear(dim_in, 512) (bias folded out by BN) -> BN1 -> LeakyReLU
    h1 = jnp.dot(x_ref[...], w1t, preferred_element_type=jnp.float32)
    h1 = _bn_leaky(h1, g1, be1)

    # Layer 2: Linear(512, 128) -> BN2 -> LeakyReLU.
    # trans_b matmul: contract h1's last dim against w2's last dim (no transpose).
    h2 = jax.lax.dot_general(
        h1.astype(w_ref.dtype), w2,
        dimension_numbers=(((1,), (1,)), ((), ())),
        preferred_element_type=jnp.float32)
    h2 = _bn_leaky(h2, g2, be2)

    o_ref[...] = h2.astype(o_ref.dtype)


def init_mlp_params(key, dim_in, dtype=jnp.float32):
    """Deterministic synthetic parameters matching the PyTorch module's shapes."""
    k1, k2, k3, k4 = jax.random.split(key, 4)
    lim1 = 1.0 / jnp.sqrt(jnp.float32(dim_in))
    lim2 = 1.0 / jnp.sqrt(jnp.float32(H1))
    return {
        "w1": jax.random.uniform(k1, (H1, dim_in), dtype, -lim1, lim1),
        "b1": jax.random.uniform(k2, (H1,), dtype, -lim1, lim1),
        "gamma1": jnp.ones((H1,), dtype),
        "beta1": jnp.zeros((H1,), dtype),
        "w2": jax.random.uniform(k3, (H2, H1), dtype, -lim2, lim2),
        "b2": jax.random.uniform(k4, (H2,), dtype, -lim2, lim2),
        "gamma2": jnp.ones((H2,), dtype),
        "beta2": jnp.zeros((H2,), dtype),
    }


def mlp_forward(x, params, matmul_dtype=jnp.bfloat16):
    """Pallas forward.

    Default matmul_dtype=bf16 (MXU-native on all generations, halves weight DMA
    bytes); BN/LeakyReLU math stays in f32. Pass jnp.float32 for the exact path.
    Linear biases are intentionally NOT passed: training-mode BN cancels them.
    """
    B, dim_in = x.shape

    # Single packed weight buffer: [w1.T ; w2] along the sublane axis -> one DMA.
    w1t = params["w1"].T                                  # (dim_in, H1)
    w2 = params["w2"]                                     # (H2, H1) un-transposed
    w_packed = jnp.concatenate([w1t, w2], axis=0).astype(matmul_dtype)
    x_in = x.astype(matmul_dtype)

    # Pack gamma/beta rows for both layers into one (2, 640) array -> one DMA.
    p_packed = jnp.stack([
        jnp.concatenate([params["gamma1"], params["gamma2"]]),
        jnp.concatenate([params["beta1"], params["beta2"]]),
    ]).astype(jnp.float32)                                # (2, H1 + H2)

    bytes_in = (x_in.size * x_in.dtype.itemsize
                + w_packed.size * w_packed.dtype.itemsize
                + p_packed.size * p_packed.dtype.itemsize)
    bytes_out = B * H2 * x.dtype.itemsize
    cost = pl.CostEstimate(
        flops=2 * B * (dim_in * H1 + H1 * H2),
        transcendentals=H1 + H2,                          # two rsqrt rows
        bytes_accessed=bytes_in + bytes_out)

    # Small problem: whole arrays live in VMEM, single kernel invocation (no grid).
    vmem = pl.BlockSpec(memory_space=pltpu.VMEM)
    return pl.pallas_call(
        functools.partial(mlp_kernel, dim_in=dim_in),
        out_shape=jax.ShapeDtypeStruct((B, H2), x.dtype),
        in_specs=[vmem] * 3,
        out_specs=vmem,
        cost_estimate=cost,
    )(x_in, w_packed, p_packed)


def mlp_reference(x, params):
    """Pure-JAX reference mirroring the PyTorch forward (training-mode BN, with biases)."""
    h1 = x @ params["w1"].T + params["b1"]
    m, v = jnp.mean(h1, 0), jnp.var(h1, 0)
    h1 = (h1 - m) / jnp.sqrt(v + BN_EPS) * params["gamma1"] + params["beta1"]
    h1 = jnp.where(h1 >= 0, h1, LEAKY_SLOPE * h1)
    h2 = h1 @ params["w2"].T + params["b2"]
    m, v = jnp.mean(h2, 0), jnp.var(h2, 0)
    h2 = (h2 - m) / jnp.sqrt(v + BN_EPS) * params["gamma2"] + params["beta2"]
    return jnp.where(h2 >= 0, h2, LEAKY_SLOPE * h2)


if __name__ == "__main__":
    B, DIM_IN = 8, 32
    key = jax.random.PRNGKey(0)
    kx, kp = jax.random.split(key)
    x = jax.random.normal(kx, (B, DIM_IN), jnp.float32)
    params = init_mlp_params(kp, DIM_IN)

    ref = mlp_reference(x, params)

    # Default bf16 MXU path (recommended on v5e/v6e/v7x): f32 accumulation + f32 epilogue.
    out = jax.block_until_ready(mlp_forward(x, params))
    assert out.shape == (B, H2), out.shape
    assert bool(jnp.all(jnp.isfinite(out)))
    assert jnp.allclose(out, ref, atol=1e-1), float(jnp.max(jnp.abs(out - ref)))

    # f32 matmul path: exact within tight tolerance (bias drop is exact under training-mode BN).
    out_f32 = jax.block_until_ready(mlp_forward(x, params, matmul_dtype=jnp.float32))
    assert out_f32.shape == (B, H2), out_f32.shape
    assert jnp.allclose(out_f32, ref, atol=1e-4, rtol=1e-4), float(
        jnp.max(jnp.abs(out_f32 - ref)))

    print("KERNEL_OK")
</pallas_src>

<mosaic_0001>
module attributes {stable_mosaic.version = 11 : i64} {
  func.func @mlp_kernel(%arg0: memref<8x32xbf16, #tpu.memory_space<vmem>>, %arg1: memref<160x512xbf16, #tpu.memory_space<vmem>>, %arg2: memref<2x640xf32, #tpu.memory_space<vmem>>, %arg3: memref<8x128xf32, #tpu.memory_space<vmem>>) attributes {dimension_semantics = [], scalar_prefetch = 0 : i64, scratch_operands = 0 : i64, tpu.core_type = #tpu.core_type<tc>} {
    %c0 = arith.constant 0 : index
    %c0_0 = arith.constant 0 : index
    %0 = vector.load %arg2[%c0, %c0_0] : memref<2x640xf32, #tpu.memory_space<vmem>>, vector<1x512xf32>
    %c1 = arith.constant 1 : index
    %c0_1 = arith.constant 0 : index
    %1 = vector.load %arg2[%c1, %c0_1] : memref<2x640xf32, #tpu.memory_space<vmem>>, vector<1x512xf32>
    %c0_2 = arith.constant 0 : index
    %c512 = arith.constant 512 : index
    %2 = vector.load %arg2[%c0_2, %c512] : memref<2x640xf32, #tpu.memory_space<vmem>>, vector<1x128xf32>
    %c1_3 = arith.constant 1 : index
    %c512_4 = arith.constant 512 : index
    %3 = vector.load %arg2[%c1_3, %c512_4] : memref<2x640xf32, #tpu.memory_space<vmem>>, vector<1x128xf32>
    %c0_5 = arith.constant 0 : index
    %c0_6 = arith.constant 0 : index
    %4 = vector.load %arg1[%c0_5, %c0_6] : memref<160x512xbf16, #tpu.memory_space<vmem>>, vector<32x512xbf16>
    %c32 = arith.constant 32 : index
    %c0_7 = arith.constant 0 : index
    %5 = vector.load %arg1[%c32, %c0_7] : memref<160x512xbf16, #tpu.memory_space<vmem>>, vector<128x512xbf16>
    %c0_8 = arith.constant 0 : index
    %c0_9 = arith.constant 0 : index
    %6 = vector.load %arg0[%c0_8, %c0_9] : memref<8x32xbf16, #tpu.memory_space<vmem>>, vector<8x32xbf16>
    %cst = arith.constant dense<0.000000e+00> : vector<8x512xf32>
    %7 = tpu.matmul %6, %4, %cst {dimension_numbers = #tpu.dot_dimension_numbers<[1], [0], [0], [1], [0, 0, 1, 1], [], []>} : vector<8x32xbf16>, vector<32x512xbf16>, vector<8x512xf32> -> vector<8x512xf32>
    %cst_10 = arith.constant dense<0.000000e+00> : vector<512xf32>
    %8 = vector.multi_reduction <add>, %7, %cst_10 [0] : vector<8x512xf32> to vector<512xf32>
    %9 = vector.shape_cast %8 : vector<512xf32> to vector<1x512xf32>
    %cst_11 = arith.constant 8.000000e+00 : f32
    %10 = vector.broadcast %cst_11 : f32 to vector<1x512xf32>
    %11 = arith.divf %9, %10 : vector<1x512xf32>
    %12 = vector.broadcast %11 : vector<1x512xf32> to vector<8x512xf32>
    %13 = arith.subf %7, %12 : vector<8x512xf32>
    %14 = arith.mulf %13, %13 : vector<8x512xf32>
    %cst_12 = arith.constant dense<0.000000e+00> : vector<512xf32>
    %15 = vector.multi_reduction <add>, %14, %cst_12 [0] : vector<8x512xf32> to vector<512xf32>
    %16 = vector.shape_cast %15 : vector<512xf32> to vector<1x512xf32>
    %cst_13 = arith.constant 8.000000e+00 : f32
    %17 = vector.broadcast %cst_13 : f32 to vector<1x512xf32>
    %18 = arith.divf %16, %17 : vector<1x512xf32>
    %cst_14 = arith.constant 9.99999974E-6 : f32
    %19 = vector.broadcast %cst_14 : f32 to vector<1x512xf32>
    %20 = arith.addf %18, %19 : vector<1x512xf32>
    %21 = math.rsqrt %20 : vector<1x512xf32>
    %22 = arith.mulf %0, %21 : vector<1x512xf32>
    %23 = vector.broadcast %22 : vector<1x512xf32> to vector<8x512xf32>
    %24 = arith.mulf %13, %23 : vector<8x512xf32>
    %25 = vector.broadcast %1 : vector<1x512xf32> to vector<8x512xf32>
    %26 = arith.addf %24, %25 : vector<8x512xf32>
    %cst_15 = arith.constant 0.00999999977 : f32
    %27 = vector.broadcast %cst_15 : f32 to vector<8x512xf32>
    %28 = arith.mulf %27, %26 : vector<8x512xf32>
    %29 = arith.maximumf %26, %28 : vector<8x512xf32>
    %30 = arith.truncf %29 : vector<8x512xf32> to vector<8x512xbf16>
    %cst_16 = arith.constant dense<0.000000e+00> : vector<8x128xf32>
    %31 = tpu.matmul %30, %5, %cst_16 {dimension_numbers = #tpu.dot_dimension_numbers<[1], [1], [0], [0], [0, 0, 1, 0], [], []>} : vector<8x512xbf16>, vector<128x512xbf16>, vector<8x128xf32> -> vector<8x128xf32>
    %cst_17 = arith.constant dense<0.000000e+00> : vector<128xf32>
    %32 = vector.multi_reduction <add>, %31, %cst_17 [0] : vector<8x128xf32> to vector<128xf32>
    %33 = vector.shape_cast %32 : vector<128xf32> to vector<1x128xf32>
    %cst_18 = arith.constant 8.000000e+00 : f32
    %34 = vector.broadcast %cst_18 : f32 to vector<1x128xf32>
    %35 = arith.divf %33, %34 : vector<1x128xf32>
    %36 = vector.broadcast %35 : vector<1x128xf32> to vector<8x128xf32>
    %37 = arith.subf %31, %36 : vector<8x128xf32>
    %38 = arith.mulf %37, %37 : vector<8x128xf32>
    %cst_19 = arith.constant dense<0.000000e+00> : vector<128xf32>
    %39 = vector.multi_reduction <add>, %38, %cst_19 [0] : vector<8x128xf32> to vector<128xf32>
    %40 = vector.shape_cast %39 : vector<128xf32> to vector<1x128xf32>
    %cst_20 = arith.constant 8.000000e+00 : f32
    %41 = vector.broadcast %cst_20 : f32 to vector<1x128xf32>
    %42 = arith.divf %40, %41 : vector<1x128xf32>
    %cst_21 = arith.constant 9.99999974E-6 : f32
    %43 = vector.broadcast %cst_21 : f32 to vector<1x128xf32>
    %44 = arith.addf %42, %43 : vector<1x128xf32>
    %45 = math.rsqrt %44 : vector<1x128xf32>
    %46 = arith.mulf %2, %45 : vector<1x128xf32>
    %47 = vector.broadcast %46 : vector<1x128xf32> to vector<8x128xf32>
    %48 = arith.mulf %37, %47 : vector<8x128xf32>
    %49 = vector.broadcast %3 : vector<1x128xf32> to vector<8x128xf32>
    %50 = arith.addf %48, %49 : vector<8x128xf32>
    %cst_22 = arith.constant 0.00999999977 : f32
    %51 = vector.broadcast %cst_22 : f32 to vector<8x128xf32>
    %52 = arith.mulf %51, %50 : vector<8x128xf32>
    %53 = arith.maximumf %50, %52 : vector<8x128xf32>
    %c0_23 = arith.constant 0 : index
    %c0_24 = arith.constant 0 : index
    %54 = vector.load %arg3[%c0_23, %c0_24] : memref<8x128xf32, #tpu.memory_space<vmem>>, vector<8x128xf32>
    tpu.vector_store %arg3[%c0_23, %c0_24], %53 {strides = array<i32>} : memref<8x128xf32, #tpu.memory_space<vmem>>, vector<8x128xf32>,
    return
  }
}

</mosaic_0001>

<llo_original>
// kernel: tpu_custom_call.1
$region0: #{tpu_custom_call.1}
  #allocation0 [shape = 'u32[]', space=smem, size = 0x4, offset = 0x4, fixed_abs, tag = 'smem constant byte address 0x4 - core index']
  #allocation1 [shape = 'u32[144,128]{1,0:T(1,128)}', space=vmem, size = 0x12000, scoped, tag = 'internal scratch']
  %s0 = inlined_call_operand.hbm [shape: bf16[8,32], index: 0, kind: input, shape index: {}]
  %s1 = inlined_call_operand.hbm [shape: bf16[160,512], index: 1, kind: input, shape index: {}]
  %s2 = inlined_call_operand.hbm [shape: f32[2,640], index: 2, kind: input, shape index: {}]
  %s3 = inlined_call_operand.hbm [shape: f32[8,128], index: 3, kind: output, shape index: {}]
  %s4 = sld [smem:[#allocation0]]
  $region34: #{tpu_custom_call.1} parent=0
    _
  %s6 = ssub.s32 1, %s4
  %s7 = scalar_select 0, %s6, %s4
  $region1: #{tpu_custom_call.1} parent=0
    #allocation2 [shape = 'u8[2048]{0}', space=vmem, size = 0x800, scoped, tag = 'input window, operand 0, single buffered']
    #allocation3 [shape = 's32[1]{0}', space=sflag, size = 0x4, scoped, tag = 'scoped memory for tpu_custom_call.1']
    #allocation4 [shape = 's32[1]{0}', space=sflag, size = 0x4, scoped, tag = 'scoped memory for tpu_custom_call.1']
    #allocation5 [shape = 'u8[163840]{0}', space=vmem, size = 0x28000, scoped, tag = 'input window, operand 1, single buffered']
    #allocation6 [shape = 's32[1]{0}', space=sflag, size = 0x4, scoped, tag = 'scoped memory for tpu_custom_call.1']
    #allocation7 [shape = 'u8[5120]{0}', space=vmem, size = 0x1400, scoped, tag = 'input window, operand 2, single buffered']
    #allocation8 [shape = 'u8[4096]{0}', space=vmem, size = 0x1000, scoped, tag = 'output window, operand 0, single buffered']
    %8 = vsyncpa [#allocation3], 0
    %9 = vsyncpa [#allocation6], 0
    %10 = vsyncpa [#allocation4], 0
    // Predicated region
    $region2: #{tpu_custom_call.1} parent=1 // pred_check
      _
    $region3: #{tpu_custom_call.1} parent=1 // pred_check_branch
      %12 = sbr.rel (0) target = $region5
    $region4: #{tpu_custom_call.1} parent=1 // pred_region
      %s14 = ssub.s32 64, 64
      %15 = vsyncadd [#allocation3], %s14
      %s17 = sshll.u32 [#allocation2], 4
      %s18 = int_to_ptr.vmem [resolvable:$true] %s17
      %20 = dma.hbm_to_vmem [thread:$0]  %s0, 64, %s18, [#allocation3]
    $region5: #{tpu_custom_call.1} parent=1 // pred_fallthru
      _
    // Predicated region
    $region6: #{tpu_custom_call.1} parent=1 // pred_check
      _
    $region7: #{tpu_custom_call.1} parent=1 // pred_check_branch
      %22 = sbr.rel (0) target = $region9
    $region8: #{tpu_custom_call.1} parent=1 // pred_region
      %s24 = ssub.s32 5120, 5120
      %25 = vsyncadd [#allocation6], %s24
      %s26 = sshll.u32 [#allocation5], 4
      %s27 = int_to_ptr.vmem [resolvable:$true] %s26
      %32 = dma.hbm_to_vmem [thread:$0]  %s1, 5120, %s27, [#allocation6], 256, 256, 16
    $region9: #{tpu_custom_call.1} parent=1 // pred_fallthru
      _
    // Predicated region
    $region10: #{tpu_custom_call.1} parent=1 // pred_check
      _
    $region11: #{tpu_custom_call.1} parent=1 // pred_check_branch
      %34 = sbr.rel (0) target = $region13
    $region12: #{tpu_custom_call.1} parent=1 // pred_region
      %s36 = ssub.s32 160, 160
      %37 = vsyncadd [#allocation6], %s36
      %s39 = sshll.u32 [#allocation7], 4
      %s40 = int_to_ptr.vmem [resolvable:$true] %s39
      %42 = dma.hbm_to_vmem [thread:$0]  %s2, 160, %s40, [#allocation6]
    $region13: #{tpu_custom_call.1} parent=1 // pred_fallthru
      _
    // Predicated region
    $region14: #{tpu_custom_call.1} parent=1 // pred_check
      _
    $region15: #{tpu_custom_call.1} parent=1 // pred_check_branch
      %44 = sbr.rel (0) target = $region17
    $region16: #{tpu_custom_call.1} parent=1 // pred_region
      %45 = dma.done [#allocation3], 64
    $region17: #{tpu_custom_call.1} parent=1 // pred_fallthru
      _
    // Predicated region
    $region18: #{tpu_custom_call.1} parent=1 // pred_check
      _
    $region19: #{tpu_custom_call.1} parent=1 // pred_check_branch
      %47 = sbr.rel (0) target = $region21
    $region20: #{tpu_custom_call.1} parent=1 // pred_region
      %48 = dma.done [#allocation6], 5120
    $region21: #{tpu_custom_call.1} parent=1 // pred_fallthru
      _
    // Predicated region
    $region22: #{tpu_custom_call.1} parent=1 // pred_check
      _
    $region23: #{tpu_custom_call.1} parent=1 // pred_check_branch
      %50 = sbr.rel (0) target = $region25
    $region24: #{tpu_custom_call.1} parent=1 // pred_region
      %51 = dma.done [#allocation6], 160
    $region25: #{tpu_custom_call.1} parent=1 // pred_fallthru
      _
    %v53 = vld [vmem:[#allocation7] ss:$2 sm:$0xf]
    %s54 = scalar_lea.vmem [#allocation7], 1
    %v55 = vld [vmem:[%s54] ss:$2 sm:$0xf]
    %v56 = vld [vmem:[#allocation7 + $0x8] sm:$0x1]
    %v57 = vld [vmem:[#allocation7 + $0x9] sm:$0x1]
    %v58 = vld [vmem:[#allocation5] sm:$0xff]
    %v59 = vld [vmem:[#allocation5 + $0x8] sm:$0xff]
    %v60 = vld [vmem:[#allocation5 + $0x10] sm:$0xff]
    %v61 = vld [vmem:[#allocation5 + $0x18] sm:$0xff]
    %v62 = vld [vmem:[#allocation5 + $0x20] sm:$0xff]
    %v63 = vld [vmem:[#allocation5 + $0x28] sm:$0xff]
    %v64 = vld [vmem:[#allocation5 + $0x30] sm:$0xff]
    %v65 = vld [vmem:[#allocation5 + $0x38] sm:$0xff]
    %v66 = vld [vmem:[#allocation5 + $0x40] sm:$0xff]
    %v67 = vld [vmem:[#allocation5 + $0x48] sm:$0xff]
    %v68 = vld [vmem:[#allocation5 + $0x50] sm:$0xff]
    %v69 = vld [vmem:[#allocation5 + $0x58] sm:$0xff]
    %v70 = vld [vmem:[#allocation5 + $0x60] sm:$0xff]
    %v71 = vld [vmem:[#allocation5 + $0x68] sm:$0xff]
    %v72 = vld [vmem:[#allocation5 + $0x70] sm:$0xff]
    %v73 = vld [vmem:[#allocation5 + $0x78] sm:$0xff]
    %v74 = vld [vmem:[#allocation5 + $0x80] sm:$0xff]
    %v75 = vld [vmem:[#allocation5 + $0x88] sm:$0xff]
    %v76 = vld [vmem:[#allocation5 + $0x90] sm:$0xff]
    %v77 = vld [vmem:[#allocation5 + $0x98] sm:$0xff]
    %v78 = vld [vmem:[#allocation5 + $0xa0] sm:$0xff]
    %v79 = vld [vmem:[#allocation5 + $0xa8] sm:$0xff]
    %v80 = vld [vmem:[#allocation5 + $0xb0] sm:$0xff]
    %v81 = vld [vmem:[#allocation5 + $0xb8] sm:$0xff]
    %v82 = vld [vmem:[#allocation5 + $0xc0] sm:$0xff]
    %v83 = vld [vmem:[#allocation5 + $0xc8] sm:$0xff]
    %v84 = vld [vmem:[#allocation5 + $0xd0] sm:$0xff]
    %v85 = vld [vmem:[#allocation5 + $0xd8] sm:$0xff]
    %v86 = vld [vmem:[#allocation5 + $0xe0] sm:$0xff]
    %v87 = vld [vmem:[#allocation5 + $0xe8] sm:$0xff]
    %v88 = vld [vmem:[#allocation5 + $0xf0] sm:$0xff]
    %v89 = vld [vmem:[#allocation5 + $0xf8] sm:$0xff]
    %v90 = vld [vmem:[#allocation5 + $0x100] sm:$0xff]
    %v91 = vld [vmem:[#allocation5 + $0x108] sm:$0xff]
    %v92 = vld [vmem:[#allocation5 + $0x110] sm:$0xff]
    %v93 = vld [vmem:[#allocation5 + $0x118] sm:$0xff]
    %v94 = vld [vmem:[#allocation5 + $0x120] sm:$0xff]
    %v95 = vld [vmem:[#allocation5 + $0x128] sm:$0xff]
    %v96 = vld [vmem:[#allocation5 + $0x130] sm:$0xff]
    %v97 = vld [vmem:[#allocation5 + $0x138] sm:$0xff]
    %v98 = vld [vmem:[#allocation2] sm:$0xf]
    %v107 = vunpack.c.l.b16 %v58
    %v108 = vunpack.c.h.b16 %v58
    %v109 = vunpack.c.l.b16 %v59
    %v110 = vunpack.c.h.b16 %v59
    %v111 = vunpack.c.l.b16 %v60
    %v112 = vunpack.c.h.b16 %v60
    %v113 = vunpack.c.l.b16 %v61
    %v114 = vunpack.c.h.b16 %v61
    %v115 = vunpack.c.l.b16 %v62
    %v116 = vunpack.c.h.b16 %v62
    %v117 = vunpack.c.l.b16 %v63
    %v118 = vunpack.c.h.b16 %v63
    %v119 = vunpack.c.l.b16 %v64
    %v120 = vunpack.c.h.b16 %v64
    %v121 = vunpack.c.l.b16 %v65
    %v122 = vunpack.c.h.b16 %v65
    %v123 = vpack.c.b16 %v111, %v107
    %v124 = vpack.c.b16 %v112, %v108
    %v125 = vpack.c.b16 %v113, %v109
    %v126 = vpack.c.b16 %v114, %v110
    %v127 = vpack.c.b16 %v119, %v115
    %v128 = vpack.c.b16 %v120, %v116
    %v129 = vpack.c.b16 %v121, %v117
    %v130 = vpack.c.b16 %v122, %v118
    %vm139 = vcmask 261120
    %v141 = vsel %vm139, %v98, 0
    %143 = vmatprep.subr.bf16.mxu0 %v124
    %144 = vmatpush1.bf16.msra.mxu0 %v123
    %145 = vmatprep.subr.bf16.mxu0 %v128
    %146 = vmatpush1.bf16.msra.mxu0 %v127
    %147 = vmatprep.subr.bf16.mxu0 0
    %148 = vmatpush1.bf16.msra.mxu0 0
    %149 = vmatprep.subr.bf16.mxu0 0
    %150 = vmatpush1.bf16.msra.mxu0 0
    %151 = vmatprep.subr.bf16.mxu0 0
    %152 = vmatpush1.bf16.msra.mxu0 0
    %153 = vmatprep.subr.bf16.mxu0 0
    %154 = vmatpush1.bf16.msra.mxu0 0
    %155 = vmatprep.subr.bf16.mxu0 0
    %156 = vmatpush1.bf16.msra.mxu0 0
    %157 = vmatprep.subr.bf16.mxu0 0
    %158 = vmatpush1.bf16.msra.mxu0 0
    %159 = vmatprep.subr.bf16.mxu0 0
    %160 = vmatpush1.bf16.msra.mxu0 0
    %161 = vmatprep.subr.bf16.mxu0 0
    %162 = vmatpush1.bf16.msra.mxu0 0
    %163 = vmatprep.subr.bf16.mxu0 0
    %164 = vmatpush1.bf16.msra.mxu0 0
    %165 = vmatprep.subr.bf16.mxu0 0
    %166 = vmatpush1.bf16.msra.mxu0 0
    %167 = vmatprep.subr.bf16.mxu0 0
    %168 = vmatpush1.bf16.msra.mxu0 0
    %169 = vmatprep.subr.bf16.mxu0 0
    %170 = vmatpush1.bf16.msra.mxu0 0
    %171 = vmatprep.subr.bf16.mxu0 0
    %172 = vmatpush1.bf16.msra.mxu0 0
    %173 = vmatprep.subr.bf16.mxu0 0
    %174 = vmatpush1.bf16.msra.mxu0 0
    %175 = vmatprep.mubr.bf16.mxu0 0
    %176 = vmatmul.mubr.bf16.gmra.mrb[0].mxu0 %v141
    %v177 = vpop.f32.mrb[0].mxu0
    %v178 = vadd.f32 0.0, %v177
    %v179 = vpop.f32.mrb[0].mxu0
    %v180 = vadd.f32 0.0, %v179
    %v181 = vpop.f32.mrb[0].mxu0
    %v182 = vpop.f32.mrb[0].mxu0
    %183 = vdwg.mxu0
    %184 = vmatprep.subr.bf16.mxu0 %v126
    %185 = vmatpush1.bf16.msra.mxu0 %v125
    %186 = vmatprep.subr.bf16.mxu0 %v130
    %187 = vmatpush1.bf16.msra.mxu0 %v129
    %188 = vmatprep.subr.bf16.mxu0 0
    %189 = vmatpush1.bf16.msra.mxu0 0
    %190 = vmatprep.subr.bf16.mxu0 0
    %191 = vmatpush1.bf16.msra.mxu0 0
    %192 = vmatprep.subr.bf16.mxu0 0
    %193 = vmatpush1.bf16.msra.mxu0 0
    %194 = vmatprep.subr.bf16.mxu0 0
    %195 = vmatpush1.bf16.msra.mxu0 0
    %196 = vmatprep.subr.bf16.mxu0 0
    %197 = vmatpush1.bf16.msra.mxu0 0
    %198 = vmatprep.subr.bf16.mxu0 0
    %199 = vmatpush1.bf16.msra.mxu0 0
    %200 = vmatprep.subr.bf16.mxu0 0
    %201 = vmatpush1.bf16.msra.mxu0 0
    %202 = vmatprep.subr.bf16.mxu0 0
    %203 = vmatpush1.bf16.msra.mxu0 0
    %204 = vmatprep.subr.bf16.mxu0 0
    %205 = vmatpush1.bf16.msra.mxu0 0
    %206 = vmatprep.subr.bf16.mxu0 0
    %207 = vmatpush1.bf16.msra.mxu0 0
    %208 = vmatprep.subr.bf16.mxu0 0
    %209 = vmatpush1.bf16.msra.mxu0 0
    %210 = vmatprep.subr.bf16.mxu0 0
    %211 = vmatpush1.bf16.msra.mxu0 0
    %212 = vmatprep.subr.bf16.mxu0 0
    %213 = vmatpush1.bf16.msra.mxu0 0
    %214 = vmatprep.subr.bf16.mxu0 0
    %215 = vmatpush1.bf16.msra.mxu0 0
    %216 = vmatprep.mubr.bf16.mxu0 0
    %217 = vmatmul.mubr.bf16.gmra.mrb[0].mxu0 %v141
    %v218 = vpop.f32.mrb[0].mxu0
    %v219 = vadd.f32 0.0, %v218
    %v220 = vpop.f32.mrb[0].mxu0
    %v221 = vadd.f32 0.0, %v220
    %v222 = vpop.f32.mrb[0].mxu0
    %v223 = vpop.f32.mrb[0].mxu0
    %224 = vdwg.mxu0
    %v225 = vrot.slane %v178, 4
    %v226 = vadd.f32 %v178, %v225
    %v227 = vrot.slane %v226, 2
    %v228 = vadd.f32 %v226, %v227
    %v229 = vrot.slane %v228, 1
    %v230 = vadd.f32 %v228, %v229
    %v231 = vrot.slane %v180, 4
    %v232 = vadd.f32 %v180, %v231
    %v233 = vrot.slane %v232, 2
    %v234 = vadd.f32 %v232, %v233
    %v235 = vrot.slane %v234, 1
    %v236 = vadd.f32 %v234, %v235
    %v237 = vrot.slane %v219, 4
    %v238 = vadd.f32 %v219, %v237
    %v239 = vrot.slane %v238, 2
    %v240 = vadd.f32 %v238, %v239
    %v241 = vrot.slane %v240, 1
    %v242 = vadd.f32 %v240, %v241
    %v243 = vrot.slane %v221, 4
    %v244 = vadd.f32 %v221, %v243
    %v245 = vrot.slane %v244, 2
    %v246 = vadd.f32 %v244, %v245
    %v247 = vrot.slane %v246, 1
    %v248 = vadd.f32 %v246, %v247
    %v249 = vrcp.pop 8.0
    %v250 = vmul.f32 %v230, %v249
    %v251 = vmul.f32 %v236, %v249
    %v252 = vmul.f32 %v242, %v249
    %v253 = vmul.f32 %v248, %v249
    %v254 = vsub.f32 %v178, %v250
    %v255 = vsub.f32 %v180, %v251
    %v256 = vsub.f32 %v219, %v252
    %v257 = vsub.f32 %v221, %v253
    %v258 = vmul.f32 %v254, %v254
    %v259 = vmul.f32 %v255, %v255
    %v260 = vmul.f32 %v256, %v256
    %v261 = vmul.f32 %v257, %v257
    %v262 = vrot.slane %v258, 4
    %v263 = vadd.f32 %v258, %v262
    %v264 = vrot.slane %v263, 2
    %v265 = vadd.f32 %v263, %v264
    %v266 = vrot.slane %v265, 1
    %v267 = vadd.f32 %v265, %v266
    %v268 = vrot.slane %v259, 4
    %v269 = vadd.f32 %v259, %v268
    %v270 = vrot.slane %v269, 2
    %v271 = vadd.f32 %v269, %v270
    %v272 = vrot.slane %v271, 1
    %v273 = vadd.f32 %v271, %v272
    %v274 = vrot.slane %v260, 4
    %v275 = vadd.f32 %v260, %v274
    %v276 = vrot.slane %v275, 2
    %v277 = vadd.f32 %v275, %v276
    %v278 = vrot.slane %v277, 1
    %v279 = vadd.f32 %v277, %v278
    %v280 = vrot.slane %v261, 4
    %v281 = vadd.f32 %v261, %v280
    %v282 = vrot.slane %v281, 2
    %v283 = vadd.f32 %v281, %v282
    %v284 = vrot.slane %v283, 1
    %v285 = vadd.f32 %v283, %v284
    %v286 = vmul.f32 %v267, %v249
    %v287 = vmul.f32 %v273, %v249
    %v288 = vmul.f32 %v279, %v249
    %v289 = vmul.f32 %v285, %v249
    %v290 = vadd.f32 %v286, 1e-05
    %v291 = vadd.f32 %v287, 1e-05
    %v292 = vadd.f32 %v288, 1e-05
    %v293 = vadd.f32 %v289, 1e-05
    %v294 = vrsqrt.pop %v290
    %v295 = vrsqrt.pop %v291
    %v296 = vrsqrt.pop %v292
    %v297 = vrsqrt.pop %v293
    %v302 = vcombine.low %v294, %v295
    %v303 = vcombine.low %v296, %v297
    %v305 = vunpack.c.l.s4 1966171168
    %v306 = vunpack.c.0.s8 %v305
    %v307 = vlaneseq
    %v308 = vshrl.u32 %v307, 7
    %v309 = vsub.s32 %v306, %v308
    %v310 = vrot.slane %v302, %v309
    %v312 = vunpack.c.l.s4 1966171168
    %v313 = vunpack.c.0.s8 %v312
    %v314 = vlaneseq
    %v315 = vshrl.u32 %v314, 7
    %v316 = vsub.s32 %v313, %v315
    %v317 = vrot.slane %v303, %v316
    %v318 = vcombine.low %v310, %v317
    %v320 = vunpack.c.l.s4 1966171168
    %v321 = vunpack.c.0.s8 %v320
    %v322 = vlaneseq
    %v323 = vshrl.u32 %v322, 7
    %v324 = vsub.s32 %v321, %v323
    %v325 = vrot.slane %v318, %v324
    %v327 = vmul.f32 %v53, %v325
    %v329 = vlaneseq
    %v330 = vshrl.u32 %v329, 7
    %v331 = vsub.s32 0, %v330
    %v332 = vrot.slane %v327, %v331
    %v333 = vlaneseq
    %v334 = vshrl.u32 %v333, 7
    %v335 = vsub.s32 1, %v334
    %v336 = vrot.slane %v327, %v335
    %v337 = vlaneseq
    %v338 = vshrl.u32 %v337, 7
    %v339 = vsub.s32 2, %v338
    %v340 = vrot.slane %v327, %v339
    %v341 = vlaneseq
    %v342 = vshrl.u32 %v341, 7
    %v343 = vsub.s32 3, %v342
    %v344 = vrot.slane %v327, %v343
    %v349 = vmul.f32 %v254, %v332
    %v350 = vmul.f32 %v255, %v336
    %v351 = vmul.f32 %v256, %v340
    %v352 = vmul.f32 %v257, %v344
    %v354 = vlaneseq
    %v355 = vshrl.u32 %v354, 7
    %v356 = vsub.s32 0, %v355
    %v357 = vrot.slane %v55, %v356
    %v358 = vlaneseq
    %v359 = vshrl.u32 %v358, 7
    %v360 = vsub.s32 1, %v359
    %v361 = vrot.slane %v55, %v360
    %v362 = vlaneseq
    %v363 = vshrl.u32 %v362, 7
    %v364 = vsub.s32 2, %v363
    %v365 = vrot.slane %v55, %v364
    %v366 = vlaneseq
    %v367 = vshrl.u32 %v366, 7
    %v368 = vsub.s32 3, %v367
    %v369 = vrot.slane %v55, %v368
    %v374 = vadd.f32 %v349, %v357
    %v375 = vadd.f32 %v350, %v361
    %v376 = vadd.f32 %v351, %v365
    %v377 = vadd.f32 %v352, %v369
    %v378 = vmul.f32 %v374, 0.01
    %v379 = vmul.f32 %v375, 0.01
    %v380 = vmul.f32 %v376, 0.01
    %v381 = vmul.f32 %v377, 0.01
    %v382 = vmax.f32 %v374, %v378
    %v383 = vmax.f32 %v375, %v379
    %v384 = vmax.f32 %v376, %v380
    %v385 = vmax.f32 %v377, %v381
    %v386 = vpack.c.bf16 %v382, %v382
    %v387 = vpack.c.bf16 %v383, %v383
    %v388 = vpack.c.bf16 %v384, %v384
    %v389 = vpack.c.bf16 %v385, %v385
    %v422 = vunpack.c.l.b16 %v66
    %v423 = vunpack.c.h.b16 %v66
    %v424 = vunpack.c.l.b16 %v67
    %v425 = vunpack.c.h.b16 %v67
    %v426 = vunpack.c.l.b16 %v68
    %v427 = vunpack.c.h.b16 %v68
    %v428 = vunpack.c.l.b16 %v69
    %v429 = vunpack.c.h.b16 %v69
    %v430 = vunpack.c.l.b16 %v70
    %v431 = vunpack.c.h.b16 %v70
    %v432 = vunpack.c.l.b16 %v71
    %v433 = vunpack.c.h.b16 %v71
    %v434 = vunpack.c.l.b16 %v72
    %v435 = vunpack.c.h.b16 %v72
    %v436 = vunpack.c.l.b16 %v73
    %v437 = vunpack.c.h.b16 %v73
    %v438 = vunpack.c.l.b16 %v74
    %v439 = vunpack.c.h.b16 %v74
    %v440 = vunpack.c.l.b16 %v75
    %v441 = vunpack.c.h.b16 %v75
    %v442 = vunpack.c.l.b16 %v76
    %v443 = vunpack.c.h.b16 %v76
    %v444 = vunpack.c.l.b16 %v77
    %v445 = vunpack.c.h.b16 %v77
    %v446 = vunpack.c.l.b16 %v78
    %v447 = vunpack.c.h.b16 %v78
    %v448 = vunpack.c.l.b16 %v79
    %v449 = vunpack.c.h.b16 %v79
    %v450 = vunpack.c.l.b16 %v80
    %v451 = vunpack.c.h.b16 %v80
    %v452 = vunpack.c.l.b16 %v81
    %v453 = vunpack.c.h.b16 %v81
    %v454 = vunpack.c.l.b16 %v82
    %v455 = vunpack.c.h.b16 %v82
    %v456 = vunpack.c.l.b16 %v83
    %v457 = vunpack.c.h.b16 %v83
    %v458 = vunpack.c.l.b16 %v84
    %v459 = vunpack.c.h.b16 %v84
    %v460 = vunpack.c.l.b16 %v85
    %v461 = vunpack.c.h.b16 %v85
    %v462 = vunpack.c.l.b16 %v86
    %v463 = vunpack.c.h.b16 %v86
    %v464 = vunpack.c.l.b16 %v87
    %v465 = vunpack.c.h.b16 %v87
    %v466 = vunpack.c.l.b16 %v88
    %v467 = vunpack.c.h.b16 %v88
    %v468 = vunpack.c.l.b16 %v89
    %v469 = vunpack.c.h.b16 %v89
    %v470 = vunpack.c.l.b16 %v90
    %v471 = vunpack.c.h.b16 %v90
    %v472 = vunpack.c.l.b16 %v91
    %v473 = vunpack.c.h.b16 %v91
    %v474 = vunpack.c.l.b16 %v92
    %v475 = vunpack.c.h.b16 %v92
    %v476 = vunpack.c.l.b16 %v93
    %v477 = vunpack.c.h.b16 %v93
    %v478 = vunpack.c.l.b16 %v94
    %v479 = vunpack.c.h.b16 %v94
    %v480 = vunpack.c.l.b16 %v95
    %v481 = vunpack.c.h.b16 %v95
    %v482 = vunpack.c.l.b16 %v96
    %v483 = vunpack.c.h.b16 %v96
    %v484 = vunpack.c.l.b16 %v97
    %v485 = vunpack.c.h.b16 %v97
    %v486 = vpack.c.b16 %v426, %v422
    %v487 = vpack.c.b16 %v427, %v423
    %v488 = vpack.c.b16 %v428, %v424
    %v489 = vpack.c.b16 %v429, %v425
    %v490 = vpack.c.b16 %v434, %v430
    %v491 = vpack.c.b16 %v435, %v431
    %v492 = vpack.c.b16 %v436, %v432
    %v493 = vpack.c.b16 %v437, %v433
    %v494 = vpack.c.b16 %v442, %v438
    %v495 = vpack.c.b16 %v443, %v439
    %v496 = vpack.c.b16 %v444, %v440
    %v497 = vpack.c.b16 %v445, %v441
    %v498 = vpack.c.b16 %v450, %v446
    %v499 = vpack.c.b16 %v451, %v447
    %v500 = vpack.c.b16 %v452, %v448
    %v501 = vpack.c.b16 %v453, %v449
    %v502 = vpack.c.b16 %v458, %v454
    %v503 = vpack.c.b16 %v459, %v455
    %v504 = vpack.c.b16 %v460, %v456
    %v505 = vpack.c.b16 %v461, %v457
    %v506 = vpack.c.b16 %v466, %v462
    %v507 = vpack.c.b16 %v467, %v463
    %v508 = vpack.c.b16 %v468, %v464
    %v509 = vpack.c.b16 %v469, %v465
    %v510 = vpack.c.b16 %v474, %v470
    %v511 = vpack.c.b16 %v475, %v471
    %v512 = vpack.c.b16 %v476, %v472
    %v513 = vpack.c.b16 %v477, %v473
    %v514 = vpack.c.b16 %v482, %v478
    %v515 = vpack.c.b16 %v483, %v479
    %v516 = vpack.c.b16 %v484, %v480
    %v517 = vpack.c.b16 %v485, %v481
    %550 = vmatprep.subr.bf16.mxu0 %v487
    %551 = vmatpush1.bf16.xpose.msra.mxu0 %v486
    %552 = vmatprep.subr.bf16.mxu0 %v491
    %553 = vmatpush1.bf16.xpose.msra.mxu0 %v490
    %554 = vmatprep.subr.bf16.mxu0 %v495
    %555 = vmatpush1.bf16.xpose.msra.mxu0 %v494
    %556 = vmatprep.subr.bf16.mxu0 %v499
    %557 = vmatpush1.bf16.xpose.msra.mxu0 %v498
    %558 = vmatprep.subr.bf16.mxu0 %v503
    %559 = vmatpush1.bf16.xpose.msra.mxu0 %v502
    %560 = vmatprep.subr.bf16.mxu0 %v507
    %561 = vmatpush1.bf16.xpose.msra.mxu0 %v506
    %562 = vmatprep.subr.bf16.mxu0 %v511
    %563 = vmatpush1.bf16.xpose.msra.mxu0 %v510
    %564 = vmatprep.subr.bf16.mxu0 %v515
    %565 = vmatpush1.bf16.xpose.msra.mxu0 %v514
    %566 = vmatprep.subr.bf16.mxu0 0
    %567 = vmatpush1.bf16.xpose.msra.mxu0 0
    %568 = vmatprep.subr.bf16.mxu0 0
    %569 = vmatpush1.bf16.xpose.msra.mxu0 0
    %570 = vmatprep.subr.bf16.mxu0 0
    %571 = vmatpush1.bf16.xpose.msra.mxu0 0
    %572 = vmatprep.subr.bf16.mxu0 0
    %573 = vmatpush1.bf16.xpose.msra.mxu0 0
    %574 = vmatprep.subr.bf16.mxu0 0
    %575 = vmatpush1.bf16.xpose.msra.mxu0 0
    %576 = vmatprep.subr.bf16.mxu0 0
    %577 = vmatpush1.bf16.xpose.msra.mxu0 0
    %578 = vmatprep.subr.bf16.mxu0 0
    %579 = vmatpush1.bf16.xpose.msra.mxu0 0
    %580 = vmatprep.subr.bf16.mxu0 0
    %581 = vmatpush1.bf16.xpose.msra.mxu0 0
    %582 = vmatprep.mubr.bf16.mxu0 %v387
    %583 = vmatmul.mubr.bf16.gmra.mrb[0].mxu0 %v386
    %v584 = vpop.f32.mrb[0].mxu0
    %v585 = vadd.f32 0.0, %v584
    %v586 = vpop.f32.mrb[0].mxu0
    %v587 = vpop.f32.mrb[0].mxu0
    %v588 = vpop.f32.mrb[0].mxu0
    %589 = vdwg.mxu0
    %590 = vmatprep.subr.bf16.mxu0 %v489
    %591 = vmatpush1.bf16.xpose.msra.mxu0 %v488
    %592 = vmatprep.subr.bf16.mxu0 %v493
    %593 = vmatpush1.bf16.xpose.msra.mxu0 %v492
    %594 = vmatprep.subr.bf16.mxu0 %v497
    %595 = vmatpush1.bf16.xpose.msra.mxu0 %v496
    %596 = vmatprep.subr.bf16.mxu0 %v501
    %597 = vmatpush1.bf16.xpose.msra.mxu0 %v500
    %598 = vmatprep.subr.bf16.mxu0 %v505
    %599 = vmatpush1.bf16.xpose.msra.mxu0 %v504
    %600 = vmatprep.subr.bf16.mxu0 %v509
    %601 = vmatpush1.bf16.xpose.msra.mxu0 %v508
    %602 = vmatprep.subr.bf16.mxu0 %v513
    %603 = vmatpush1.bf16.xpose.msra.mxu0 %v512
    %604 = vmatprep.subr.bf16.mxu0 %v517
    %605 = vmatpush1.bf16.xpose.msra.mxu0 %v516
    %606 = vmatprep.subr.bf16.mxu0 0
    %607 = vmatpush1.bf16.xpose.msra.mxu0 0
    %608 = vmatprep.subr.bf16.mxu0 0
    %609 = vmatpush1.bf16.xpose.msra.mxu0 0
    %610 = vmatprep.subr.bf16.mxu0 0
    %611 = vmatpush1.bf16.xpose.msra.mxu0 0
    %612 = vmatprep.subr.bf16.mxu0 0
    %613 = vmatpush1.bf16.xpose.msra.mxu0 0
    %614 = vmatprep.subr.bf16.mxu0 0
    %615 = vmatpush1.bf16.xpose.msra.mxu0 0
    %616 = vmatprep.subr.bf16.mxu0 0
    %617 = vmatpush1.bf16.xpose.msra.mxu0 0
    %618 = vmatprep.subr.bf16.mxu0 0
    %619 = vmatpush1.bf16.xpose.msra.mxu0 0
    %620 = vmatprep.subr.bf16.mxu0 0
    %621 = vmatpush1.bf16.xpose.msra.mxu0 0
    %622 = vmatprep.mubr.bf16.mxu0 %v389
    %623 = vmatmul.mubr.bf16.gmra.mrb[0].mxu0 %v388
    %v624 = vpop.f32.mrb[0].mxu0
    %v625 = vadd.f32 %v585, %v624
    %v626 = vpop.f32.mrb[0].mxu0
    %v627 = vpop.f32.mrb[0].mxu0
    %v628 = vpop.f32.mrb[0].mxu0
    %629 = vdwg.mxu0
    %v630 = vrot.slane %v625, 4
    %v631 = vadd.f32 %v625, %v630
    %v632 = vrot.slane %v631, 2
    %v633 = vadd.f32 %v631, %v632
    %v634 = vrot.slane %v633, 1
    %v635 = vadd.f32 %v633, %v634
    %v636 = vmul.f32 %v635, %v249
    %v637 = vsub.f32 %v625, %v636
    %v638 = vmul.f32 %v637, %v637
    %v639 = vrot.slane %v638, 4
    %v640 = vadd.f32 %v638, %v639
    %v641 = vrot.slane %v640, 2
    %v642 = vadd.f32 %v640, %v641
    %v643 = vrot.slane %v642, 1
    %v644 = vadd.f32 %v642, %v643
    %v645 = vmul.f32 %v644, %v249
    %v646 = vadd.f32 %v645, 1e-05
    %v647 = vrsqrt.pop %v646
    %v648 = vmul.f32 %v56, %v647
    %v649 = vlaneseq
    %v650 = vshrl.u32 %v649, 7
    %v651 = vsub.s32 0, %v650
    %v652 = vrot.slane %v648, %v651
    %v653 = vmul.f32 %v637, %v652
    %v654 = vlaneseq
    %v655 = vshrl.u32 %v654, 7
    %v656 = vsub.s32 0, %v655
    %v657 = vrot.slane %v57, %v656
    %v658 = vadd.f32 %v653, %v657
    %v659 = vmul.f32 %v658, 0.01
    %v660 = vmax.f32 %v658, %v659
    %661 = vst [vmem:[#allocation8] sm:$0xff] %v660
    // Predicated region
    $region26: #{tpu_custom_call.1} parent=1 // pred_check
      _
    $region27: #{tpu_custom_call.1} parent=1 // pred_check_branch
      %663 = sbr.rel (0) target = $region29
    $region28: #{tpu_custom_call.1} parent=1 // pred_region
      %s665 = ssub.s32 128, 128
      %666 = vsyncadd [#allocation4], %s665
      %s668 = sshll.u32 [#allocation8], 4
      %s669 = int_to_ptr.vmem [resolvable:$true] %s668
      %671 = dma.vmem_to_hbm [thread:$0]  %s669, 128, %s3, [#allocation4]
    $region29: #{tpu_custom_call.1} parent=1 // pred_fallthru
      _
    // Predicated region
    $region30: #{tpu_custom_call.1} parent=1 // pred_check
      _
    $region31: #{tpu_custom_call.1} parent=1 // pred_check_branch
      %673 = sbr.rel (0) target = $region33
    $region32: #{tpu_custom_call.1} parent=1 // pred_region
      %674 = dma.done [#allocation4], 128
    $region33: #{tpu_custom_call.1} parent=1 // pred_fallthru
      _
    %675 = vsyncpa [#allocation3], 1
    %676 = vsyncpa [#allocation6], 1
    %677 = vsyncpa [#allocation4], 1

</llo_original>
